<compile_context>
chip_gen: v6e
topology: v6e:2x2x1
jax: 0.10.0
libtpu: 0.0.40
codegen_flags: <defaults>
</compile_context>

<pallas_src>
import functools

import jax
import jax.numpy as jnp
from jax.experimental import pallas as pl
from jax.experimental.pallas import tpu as pltpu


def _round_up(x, m):
    return (x + m - 1) // m * m


def _choose_tile_n(N, *, target_steps=8, max_tile_n=32768):
    """Pick a 128-multiple tile of the N (lane) axis.

    Aims for ~target_steps grid steps (amortizes the ~600-cycle per-step overhead,
    keeps enough steps for v7x 2-TC megacore sharding), caps the tile so the
    (U, TN) f32 intermediates fit comfortably in VMEM on every generation, and
    then re-balances so padding waste is bounded to ~<128 columns per tile.
    """
    n128 = _round_up(max(N, 1), 128)
    tn = _round_up(pl.cdiv(n128, target_steps), 128)
    tn = min(tn, max_tile_n, n128)
    num_tiles = pl.cdiv(n128, tn)
    tn = min(_round_up(pl.cdiv(n128, num_tiles), 128), n128)
    return tn


def meta_wave_kernel(x_ref, w1_ref, b1_ref, w2_ref, b2_ref, w3_ref, b3_ref, o_ref,
                     *, bf16_matmul=False):
    x = x_ref[...]                                                   # (1, TN)

    # Layer "inp": Linear(1, U) + tanh.  K=1 contraction -> pure VPU broadcast:
    # h[u, n] = tanh(w1[u] * x[n] + b1[u])
    h = jnp.tanh(w1_ref[...] * x + b1_ref[...])                      # (U, TN)

    # Layer "layer1": Linear(U, U) + tanh on the MXU, f32 accumulation.
    w2 = w2_ref[...]
    if bf16_matmul:
        # bf16 MXU inputs (native on v6e/v7x); ~1e-3 accuracy, so flag-gated.
        w2 = w2.astype(jnp.bfloat16)
        h = h.astype(jnp.bfloat16)
    h = jnp.tanh(
        jnp.dot(w2, h, preferred_element_type=jnp.float32) + b2_ref[...]
    )                                                                # (U, TN)

    # Layer "out": Linear(U, 1) as VPU multiply + sublane reduction -> lane-dense (1, TN).
    o_ref[...] = (
        jnp.sum(w3_ref[...] * h, axis=0, keepdims=True) + b3_ref[...]
    ).astype(o_ref.dtype)                                            # (1, TN)


def meta_wave_forward(x, params, *, target_steps=8, max_tile_n=32768,
                      bf16_matmul=False):
    """x: (N, 1) float32 (PyTorch layout).  params hold weights in (out_major) layout:
       w1:(U,1) b1:(U,1) w2:(U,U) b2:(U,1) w3:(U,1) b3:(1,1)."""
    N = x.shape[0]
    U = params["w1"].shape[0]

    # Lane-dense layout: samples on the lane axis.
    xt = x.reshape(1, N).astype(jnp.float32)

    # Adaptive N-tiling (128-multiples); pad N up to a whole number of tiles.
    TN = _choose_tile_n(N, target_steps=target_steps, max_tile_n=max_tile_n)
    Np = _round_up(N, TN)
    if Np != N:
        xt = jnp.pad(xt, ((0, 0), (0, Np - N)))

    # VMEM budget: ~4 live (U, TN) f32 intermediates + double-buffered x/out
    # streaming tiles + resident weights.  Add headroom and clamp so the request
    # is safe on every generation (v5e default scoped VMEM is 16 MiB; v7x physical
    # VMEM per TC is 64 MiB, so never ask for more than 40 MiB).
    vmem_need = (4 * U * TN + 2 * 2 * TN + (U * U + 4 * U + 1)) * 4
    vmem_limit = int(min(max(vmem_need + (8 << 20), 16 << 20), 40 << 20))

    const = lambda shape: pl.BlockSpec(shape, lambda i: (0, 0))  # VMEM-resident weights

    kernel = functools.partial(meta_wave_kernel, bf16_matmul=bf16_matmul)

    out = pl.pallas_call(
        kernel,
        out_shape=jax.ShapeDtypeStruct((1, Np), jnp.float32),
        grid=(Np // TN,),
        in_specs=[
            pl.BlockSpec((1, TN), lambda i: (0, i)),  # x   (streamed over N)
            const((U, 1)),                            # w1
            const((U, 1)),                            # b1
            const((U, U)),                            # w2
            const((U, 1)),                            # b2
            const((U, 1)),                            # w3
            const((1, 1)),                            # b3
        ],
        out_specs=pl.BlockSpec((1, TN), lambda i: (0, i)),
        compiler_params=pltpu.CompilerParams(
            dimension_semantics=("parallel",),        # shard N tiles across TCs (v7x)
            vmem_limit_bytes=vmem_limit,
        ),
    )(
        xt,
        params["w1"], params["b1"],
        params["w2"], params["b2"],
        params["w3"], params["b3"],
    )

    return out[0, :N].reshape(N, 1)


def init_params(key, units):
    """Deterministic init mirroring PyTorch Linear default U(-1/sqrt(fan_in), +).
    Weights stored out-major: w1:(U,1), w2:(U,U) (== layer1.weight), w3:(U,1)."""
    k1, k2, k3, k4, k5, k6 = jax.random.split(key, 6)

    def lin(kw, kb, fan_in, fan_out):
        bound = 1.0 / jnp.sqrt(jnp.asarray(fan_in, jnp.float32))
        # (out_features, in_features) like PyTorch's .weight
        w = jax.random.uniform(kw, (fan_out, fan_in), jnp.float32, -bound, bound)
        b = jax.random.uniform(kb, (fan_out, 1), jnp.float32, -bound, bound)
        return w, b

    w1, b1 = lin(k1, k2, 1, units)        # self.inp     -> (U,1), (U,1)
    w2, b2 = lin(k3, k4, units, units)    # self.layer1  -> (U,U), (U,1)
    w3, b3 = lin(k5, k6, units, 1)        # self.out     -> (1,U), (1,1)
    return {
        "w1": w1, "b1": b1,
        "w2": w2, "b2": b2,
        "w3": w3.T,          # store as (U,1) for the VPU reduce form
        "b3": b3,            # (1,1)
    }


def meta_wave_reference(x, p):
    """Plain-JAX reference matching the PyTorch module."""
    h = jnp.tanh(x @ p["w1"].T + p["b1"].T)   # (N, U)
    h = jnp.tanh(h @ p["w2"].T + p["b2"].T)   # (N, U)
    return h @ p["w3"] + p["b3"]              # (N, 1)


if __name__ == "__main__":
    key = jax.random.PRNGKey(0)
    kx, kx2, kp = jax.random.split(key, 3)

    UNITS = 32   # hidden width

    # Small single-tile case.
    N = 8
    x = jax.random.normal(kx, (N, 1), jnp.float32)
    params = init_params(kp, UNITS)

    out = meta_wave_forward(x, params)
    out = jax.block_until_ready(out)
    ref = meta_wave_reference(x, params)
    assert out.shape == (N, 1)
    assert jnp.allclose(out, ref, atol=1e-5, rtol=1e-5), "mismatch vs reference (N=8)"

    # Larger case exercising the adaptive multi-tile path (grid of ~8 parallel steps,
    # last tile zero-padded and sliced off).
    N2 = 5000
    x2 = jax.random.normal(kx2, (N2, 1), jnp.float32)
    out2 = meta_wave_forward(x2, params)
    out2 = jax.block_until_ready(out2)
    ref2 = meta_wave_reference(x2, params)
    assert out2.shape == (N2, 1)
    assert jnp.allclose(out2, ref2, atol=1e-5, rtol=1e-5), "mismatch vs reference (N=5000)"

    print("KERNEL_OK")
</pallas_src>

<mosaic_0001>
module attributes {stable_mosaic.version = 11 : i64} {
  func.func @meta_wave_kernel(%arg0: i32, %arg1: memref<1x128xf32, #tpu.memory_space<vmem>>, %arg2: memref<32x1xf32, #tpu.memory_space<vmem>>, %arg3: memref<32x1xf32, #tpu.memory_space<vmem>>, %arg4: memref<32x32xf32, #tpu.memory_space<vmem>>, %arg5: memref<32x1xf32, #tpu.memory_space<vmem>>, %arg6: memref<32x1xf32, #tpu.memory_space<vmem>>, %arg7: memref<1x1xf32, #tpu.memory_space<vmem>>, %arg8: memref<1x128xf32, #tpu.memory_space<vmem>>) attributes {dimension_semantics = [#tpu.dimension_semantics<parallel>], iteration_bounds = array<i64: 1>, scalar_prefetch = 0 : i64, scratch_operands = 0 : i64, tpu.core_type = #tpu.core_type<tc>, window_params = [{transform_indices = @transform_0, window_bounds = array<i64: 1, 128>}, {pipeline_mode = #tpu.pipeline_mode<synchronous>, transform_indices = @transform_1, window_bounds = array<i64: 32, 1>}, {pipeline_mode = #tpu.pipeline_mode<synchronous>, transform_indices = @transform_2, window_bounds = array<i64: 32, 1>}, {pipeline_mode = #tpu.pipeline_mode<synchronous>, transform_indices = @transform_3, window_bounds = array<i64: 32, 32>}, {pipeline_mode = #tpu.pipeline_mode<synchronous>, transform_indices = @transform_4, window_bounds = array<i64: 32, 1>}, {pipeline_mode = #tpu.pipeline_mode<synchronous>, transform_indices = @transform_5, window_bounds = array<i64: 32, 1>}, {pipeline_mode = #tpu.pipeline_mode<synchronous>, transform_indices = @transform_6, window_bounds = array<i64: 1, 1>}, {transform_indices = @transform_7, window_bounds = array<i64: 1, 128>}]} {
    %c0 = arith.constant 0 : index
    %c0_0 = arith.constant 0 : index
    %0 = vector.load %arg1[%c0, %c0_0] : memref<1x128xf32, #tpu.memory_space<vmem>>, vector<1x128xf32>
    %c0_1 = arith.constant 0 : index
    %c0_2 = arith.constant 0 : index
    %1 = vector.load %arg2[%c0_1, %c0_2] : memref<32x1xf32, #tpu.memory_space<vmem>>, vector<32x1xf32>
    %2 = vector.broadcast %1 : vector<32x1xf32> to vector<32x128xf32>
    %3 = vector.broadcast %0 : vector<1x128xf32> to vector<32x128xf32>
    %4 = arith.mulf %2, %3 : vector<32x128xf32>
    %c0_3 = arith.constant 0 : index
    %c0_4 = arith.constant 0 : index
    %5 = vector.load %arg3[%c0_3, %c0_4] : memref<32x1xf32, #tpu.memory_space<vmem>>, vector<32x1xf32>
    %6 = vector.broadcast %5 : vector<32x1xf32> to vector<32x128xf32>
    %7 = arith.addf %4, %6 : vector<32x128xf32>
    %8 = math.tanh %7 : vector<32x128xf32>
    %c0_5 = arith.constant 0 : index
    %c0_6 = arith.constant 0 : index
    %9 = vector.load %arg4[%c0_5, %c0_6] : memref<32x32xf32, #tpu.memory_space<vmem>>, vector<32x32xf32>
    %cst = arith.constant dense<0.000000e+00> : vector<32x128xf32>
    %10 = tpu.matmul %9, %8, %cst {dimension_numbers = #tpu.dot_dimension_numbers<[1], [0], [0], [1], [0, 0, 1, 1], [], []>} : vector<32x32xf32>, vector<32x128xf32>, vector<32x128xf32> -> vector<32x128xf32>
    %c0_7 = arith.constant 0 : index
    %c0_8 = arith.constant 0 : index
    %11 = vector.load %arg5[%c0_7, %c0_8] : memref<32x1xf32, #tpu.memory_space<vmem>>, vector<32x1xf32>
    %12 = vector.broadcast %11 : vector<32x1xf32> to vector<32x128xf32>
    %13 = arith.addf %10, %12 : vector<32x128xf32>
    %14 = math.tanh %13 : vector<32x128xf32>
    %c0_9 = arith.constant 0 : index
    %c0_10 = arith.constant 0 : index
    %15 = vector.load %arg6[%c0_9, %c0_10] : memref<32x1xf32, #tpu.memory_space<vmem>>, vector<32x1xf32>
    %16 = vector.broadcast %15 : vector<32x1xf32> to vector<32x128xf32>
    %17 = arith.mulf %16, %14 : vector<32x128xf32>
    %cst_11 = arith.constant dense<0.000000e+00> : vector<128xf32>
    %18 = vector.multi_reduction <add>, %17, %cst_11 [0] : vector<32x128xf32> to vector<128xf32>
    %19 = vector.shape_cast %18 : vector<128xf32> to vector<1x128xf32>
    %c0_12 = arith.constant 0 : index
    %c0_13 = arith.constant 0 : index
    %20 = vector.load %arg7[%c0_12, %c0_13] : memref<1x1xf32, #tpu.memory_space<vmem>>, vector<1x1xf32>
    %21 = vector.broadcast %20 : vector<1x1xf32> to vector<1x128xf32>
    %22 = arith.addf %19, %21 : vector<1x128xf32>
    %c0_14 = arith.constant 0 : index
    %c0_15 = arith.constant 0 : index
    %23 = vector.load %arg8[%c0_14, %c0_15] : memref<1x128xf32, #tpu.memory_space<vmem>>, vector<1x128xf32>
    tpu.vector_store %arg8[%c0_14, %c0_15], %22 {strides = array<i32>} : memref<1x128xf32, #tpu.memory_space<vmem>>, vector<1x128xf32>,
    return
  }
  func.func @transform_0(%arg0: i32) -> (i32, i32) {
    %c0_i32 = arith.constant 0 : i32
    %c0_i32_0 = arith.constant 0 : i32
    return %c0_i32, %arg0 : i32, i32
  }
  func.func @transform_1(%arg0: i32) -> (i32, i32) {
    %c0_i32 = arith.constant 0 : i32
    %c0_i32_0 = arith.constant 0 : i32
    %c0_i32_1 = arith.constant 0 : i32
    return %c0_i32, %c0_i32_0 : i32, i32
  }
  func.func @transform_2(%arg0: i32) -> (i32, i32) {
    %c0_i32 = arith.constant 0 : i32
    %c0_i32_0 = arith.constant 0 : i32
    %c0_i32_1 = arith.constant 0 : i32
    return %c0_i32, %c0_i32_0 : i32, i32
  }
  func.func @transform_3(%arg0: i32) -> (i32, i32) {
    %c0_i32 = arith.constant 0 : i32
    %c0_i32_0 = arith.constant 0 : i32
    %c0_i32_1 = arith.constant 0 : i32
    return %c0_i32, %c0_i32_0 : i32, i32
  }
  func.func @transform_4(%arg0: i32) -> (i32, i32) {
    %c0_i32 = arith.constant 0 : i32
    %c0_i32_0 = arith.constant 0 : i32
    %c0_i32_1 = arith.constant 0 : i32
    return %c0_i32, %c0_i32_0 : i32, i32
  }
  func.func @transform_5(%arg0: i32) -> (i32, i32) {
    %c0_i32 = arith.constant 0 : i32
    %c0_i32_0 = arith.constant 0 : i32
    %c0_i32_1 = arith.constant 0 : i32
    return %c0_i32, %c0_i32_0 : i32, i32
  }
  func.func @transform_6(%arg0: i32) -> (i32, i32) {
    %c0_i32 = arith.constant 0 : i32
    %c0_i32_0 = arith.constant 0 : i32
    %c0_i32_1 = arith.constant 0 : i32
    return %c0_i32, %c0_i32_0 : i32, i32
  }
  func.func @transform_7(%arg0: i32) -> (i32, i32) {
    %c0_i32 = arith.constant 0 : i32
    %c0_i32_0 = arith.constant 0 : i32
    return %c0_i32, %arg0 : i32, i32
  }
}

</mosaic_0001>

<llo_original>
// kernel: tpu_custom_call.1
$region0: #{tpu_custom_call.1}
  #allocation0 [shape = 'u32[]', space=smem, size = 0x4, offset = 0x4, fixed_abs, tag = 'smem constant byte address 0x4 - core index']
  #allocation1 [shape = 'u32[144,128]{1,0:T(1,128)}', space=vmem, size = 0x12000, scoped, tag = 'internal scratch']
  #allocation2 [shape = 'f32[1,1]{1,0:T(1,128)S(1)}', space=vmem, size = 0x200, scoped, tag = 'scoped memory for tpu_custom_call.1']
  %s0 = inlined_call_operand.vmem [shape: f32[1,128], index: 0, kind: input, shape index: {}]
  %s1 = inlined_call_operand.vmem [shape: f32[32,1], index: 1, kind: input, shape index: {}]
  %s2 = inlined_call_operand.vmem [shape: f32[32,1], index: 2, kind: input, shape index: {}]
  %s3 = inlined_call_operand.vmem [shape: f32[32,32], index: 3, kind: input, shape index: {}]
  %s4 = inlined_call_operand.vmem [shape: f32[32,1], index: 4, kind: input, shape index: {}]
  %s5 = inlined_call_operand.vmem [shape: f32[32,1], index: 5, kind: input, shape index: {}]
  %s6 = inlined_call_operand.<no memory space> [shape: f32[1,1], index: 6, kind: input, shape index: {}]
  %s7 = inlined_call_operand.hbm [shape: f32[1,128], index: 7, kind: output, shape index: {}]
  %s8 = sld [smem:[#allocation0]]
  $region38: #{tpu_custom_call.1} parent=0
    _
  %s10 = ssub.s32 1, %s8
  %s11 = scalar_select 0, %s10, %s8
  %v12 = vstv %s6
  %13 = vst [vmem:[#allocation2] sm:$0x1] %v12
  $region1: #{tpu_custom_call.1} parent=0
    #allocation3 [shape = 'u8[512]{0}', space=vmem, size = 0x400, scoped, tag = 'output window, operand 0, single buffered']
    #allocation4 [shape = 's32[1]{0}', space=sflag, size = 0x4, scoped, tag = 'scoped memory for tpu_custom_call.1']
    %14 = vsyncpa [#allocation4], 0
    // Predicated region
    $region2: #{tpu_custom_call.1} parent=1 // pred_check
      _
    $region3: #{tpu_custom_call.1} parent=1 // pred_check_branch
      %16 = sbr.rel (0) target = $region5
    $region4: #{tpu_custom_call.1} parent=1 // pred_region
      _
    $region5: #{tpu_custom_call.1} parent=1 // pred_fallthru
      _
    // Predicated region
    $region6: #{tpu_custom_call.1} parent=1 // pred_check
      _
    $region7: #{tpu_custom_call.1} parent=1 // pred_check_branch
      %18 = sbr.rel (0) target = $region9
    $region8: #{tpu_custom_call.1} parent=1 // pred_region
      _
    $region9: #{tpu_custom_call.1} parent=1 // pred_fallthru
      _
    // Predicated region
    $region10: #{tpu_custom_call.1} parent=1 // pred_check
      _
    $region11: #{tpu_custom_call.1} parent=1 // pred_check_branch
      %20 = sbr.rel (0) target = $region13
    $region12: #{tpu_custom_call.1} parent=1 // pred_region
      _
    $region13: #{tpu_custom_call.1} parent=1 // pred_fallthru
      _
    // Predicated region
    $region14: #{tpu_custom_call.1} parent=1 // pred_check
      _
    $region15: #{tpu_custom_call.1} parent=1 // pred_check_branch
      %22 = sbr.rel (0) target = $region17
    $region16: #{tpu_custom_call.1} parent=1 // pred_region
      _
    $region17: #{tpu_custom_call.1} parent=1 // pred_fallthru
      _
    // Predicated region
    $region18: #{tpu_custom_call.1} parent=1 // pred_check
      _
    $region19: #{tpu_custom_call.1} parent=1 // pred_check_branch
      %24 = sbr.rel (0) target = $region21
    $region20: #{tpu_custom_call.1} parent=1 // pred_region
      _
    $region21: #{tpu_custom_call.1} parent=1 // pred_fallthru
      _
    // Predicated region
    $region22: #{tpu_custom_call.1} parent=1 // pred_check
      _
    $region23: #{tpu_custom_call.1} parent=1 // pred_check_branch
      %26 = sbr.rel (0) target = $region25
    $region24: #{tpu_custom_call.1} parent=1 // pred_region
      _
    $region25: #{tpu_custom_call.1} parent=1 // pred_fallthru
      _
    // Predicated region
    $region26: #{tpu_custom_call.1} parent=1 // pred_check
      _
    $region27: #{tpu_custom_call.1} parent=1 // pred_check_branch
      %28 = sbr.rel (0) target = $region29
    $region28: #{tpu_custom_call.1} parent=1 // pred_region
      _
    $region29: #{tpu_custom_call.1} parent=1 // pred_fallthru
      _
    %v29 = vld [vmem:[%s0] sm:$0x1]
    %v30 = vld [vmem:[%s1] sm:$0xff]
    %v31 = vld [vmem:[%s1 + $0x8] sm:$0xff]
    %v32 = vld [vmem:[%s1 + $0x10] sm:$0xff]
    %v33 = vld [vmem:[%s1 + $0x18] sm:$0xff]
    %35 = vset.pattern.permute.xlu0 0
    %36 = vperm.xlu0 %35, %v30
    %v37 = vpop.permute.xlu0 %36
    %40 = vset.pattern.permute.xlu0 0
    %41 = vperm.xlu0 %40, %v31
    %v42 = vpop.permute.xlu0 %41
    %45 = vset.pattern.permute.xlu0 0
    %46 = vperm.xlu0 %45, %v32
    %v47 = vpop.permute.xlu0 %46
    %50 = vset.pattern.permute.xlu0 0
    %51 = vperm.xlu0 %50, %v33
    %v52 = vpop.permute.xlu0 %51
    %v55 = vlaneseq
    %v56 = vshrl.u32 %v55, 7
    %v57 = vsub.s32 0, %v56
    %v58 = vrot.slane %v29, %v57
    %v60 = vmul.f32 %v37, %v58
    %v61 = vmul.f32 %v42, %v58
    %v62 = vmul.f32 %v47, %v58
    %v63 = vmul.f32 %v52, %v58
    %v64 = vld [vmem:[%s2] sm:$0xff]
    %v65 = vld [vmem:[%s2 + $0x8] sm:$0xff]
    %v66 = vld [vmem:[%s2 + $0x10] sm:$0xff]
    %v67 = vld [vmem:[%s2 + $0x18] sm:$0xff]
    %69 = vset.pattern.permute.xlu0 0
    %70 = vperm.xlu0 %69, %v64
    %v71 = vpop.permute.xlu0 %70
    %74 = vset.pattern.permute.xlu0 0
    %75 = vperm.xlu0 %74, %v65
    %v76 = vpop.permute.xlu0 %75
    %79 = vset.pattern.permute.xlu0 0
    %80 = vperm.xlu0 %79, %v66
    %v81 = vpop.permute.xlu0 %80
    %84 = vset.pattern.permute.xlu0 0
    %85 = vperm.xlu0 %84, %v67
    %v86 = vpop.permute.xlu0 %85
    %v88 = vadd.f32 %v60, %v71
    %v89 = vadd.f32 %v61, %v76
    %v90 = vadd.f32 %v62, %v81
    %v91 = vadd.f32 %v63, %v86
    %v92 = vtanh.pop %v88
    %v93 = vtanh.pop %v89
    %v94 = vtanh.pop %v90
    %v95 = vtanh.pop %v91
    %v96 = vld [vmem:[%s3] sm:$0xff]
    %v97 = vld [vmem:[%s3 + $0x8] sm:$0xff]
    %v98 = vld [vmem:[%s3 + $0x10] sm:$0xff]
    %v99 = vld [vmem:[%s3 + $0x18] sm:$0xff]
    %v100 = vld [vmem:[%s4] sm:$0xff]
    %v101 = vld [vmem:[%s4 + $0x8] sm:$0xff]
    %v102 = vld [vmem:[%s4 + $0x10] sm:$0xff]
    %v103 = vld [vmem:[%s4 + $0x18] sm:$0xff]
    %105 = vset.pattern.permute.xlu0 0
    %106 = vperm.xlu0 %105, %v100
    %v107 = vpop.permute.xlu0 %106
    %110 = vset.pattern.permute.xlu0 0
    %111 = vperm.xlu0 %110, %v101
    %v112 = vpop.permute.xlu0 %111
    %115 = vset.pattern.permute.xlu0 0
    %116 = vperm.xlu0 %115, %v102
    %v117 = vpop.permute.xlu0 %116
    %120 = vset.pattern.permute.xlu0 0
    %121 = vperm.xlu0 %120, %v103
    %v122 = vpop.permute.xlu0 %121
    %vm124 = vcmask 261120
    %v126 = vsel %vm124, %v96, 0
    %v129 = vsel %vm124, %v97, 0
    %v132 = vsel %vm124, %v98, 0
    %v135 = vsel %vm124, %v99, 0
    %137 = vmatprep.subr.mxu0 0.0
    %138 = vmatpush1.msra.mxu0 0.0
    %139 = vmatprep.subr.mxu0 0.0
    %140 = vmatpush1.msra.mxu0 0.0
    %141 = vmatprep.subr.mxu0 0.0
    %142 = vmatpush1.msra.mxu0 0.0
    %143 = vmatprep.subr.mxu0 0.0
    %144 = vmatpush1.msra.mxu0 0.0
    %145 = vmatprep.subr.mxu0 0.0
    %146 = vmatpush1.msra.mxu0 0.0
    %147 = vmatprep.subr.mxu0 0.0
    %148 = vmatpush1.msra.mxu0 0.0
    %149 = vmatprep.subr.mxu0 0.0
    %150 = vmatpush1.msra.mxu0 0.0
    %151 = vmatprep.subr.mxu0 0.0
    %152 = vmatpush1.msra.mxu0 0.0
    %153 = vmatprep.subr.mxu0 0.0
    %154 = vmatpush1.msra.mxu0 0.0
    %155 = vmatprep.subr.mxu0 0.0
    %156 = vmatpush1.msra.mxu0 0.0
    %157 = vmatprep.subr.mxu0 0.0
    %158 = vmatpush1.msra.mxu0 0.0
    %159 = vmatprep.subr.mxu0 0.0
    %160 = vmatpush1.msra.mxu0 0.0
    %161 = vmatprep.subr.mxu0 0.0
    %162 = vmatpush1.msra.mxu0 %v95
    %163 = vmatprep.subr.mxu0 0.0
    %164 = vmatpush1.msra.mxu0 %v94
    %165 = vmatprep.subr.mxu0 0.0
    %166 = vmatpush1.msra.mxu0 %v93
    %167 = vmatprep.subr.mxu0 0.0
    %168 = vmatpush1.msra.mxu0 %v92
    %169 = vmatprep.subr.mxu0 0.0
    %170 = vmatpush2.msra.mxu0 0.0
    %171 = vmatprep.subr.mxu0 0.0
    %172 = vmatpush2.msra.mxu0 0.0
    %173 = vmatprep.subr.mxu0 0.0
    %174 = vmatpush2.msra.mxu0 0.0
    %175 = vmatprep.subr.mxu0 0.0
    %176 = vmatpush2.msra.mxu0 0.0
    %177 = vmatprep.subr.mxu0 0.0
    %178 = vmatpush2.msra.mxu0 0.0
    %179 = vmatprep.subr.mxu0 0.0
    %180 = vmatpush2.msra.mxu0 0.0
    %181 = vmatprep.subr.mxu0 0.0
    %182 = vmatpush2.msra.mxu0 0.0
    %183 = vmatprep.subr.mxu0 0.0
    %184 = vmatpush2.msra.mxu0 0.0
    %185 = vmatprep.subr.mxu0 0.0
    %186 = vmatpush2.msra.mxu0 0.0
    %187 = vmatprep.subr.mxu0 0.0
    %188 = vmatpush2.msra.mxu0 0.0
    %189 = vmatprep.subr.mxu0 0.0
    %190 = vmatpush2.msra.mxu0 0.0
    %191 = vmatprep.subr.mxu0 0.0
    %192 = vmatpush2.msra.mxu0 0.0
    %193 = vmatprep.subr.mxu0 0.0
    %194 = vmatpush2.msra.mxu0 0.0
    %195 = vmatprep.subr.mxu0 0.0
    %196 = vmatpush2.msra.mxu0 0.0
    %197 = vmatprep.subr.mxu0 0.0
    %198 = vmatpush2.msra.mxu0 0.0
    %199 = vmatprep.subr.mxu0 0.0
    %200 = vmatpush2.msra.mxu0 0.0
    %201 = vmatprep.mubr.f32.mxu0 0.0
    %202 = vmatmul.mubr.f32.gmra.mxu0 %v126
    %v203 = vpop.f32.mrf.mxu0
    %v204 = vadd.f32 %v107, %v203
    %v205 = vpop.f32.mrf.mxu0
    %206 = vmatprep.mubr.f32.mxu0 0.0
    %207 = vmatmul.mubr.f32.gmra.mxu0 %v129
    %v208 = vpop.f32.mrf.mxu0
    %v209 = vadd.f32 %v112, %v208
    %v210 = vpop.f32.mrf.mxu0
    %211 = vmatprep.mubr.f32.mxu0 0.0
    %212 = vmatmul.mubr.f32.gmra.mxu0 %v132
    %v213 = vpop.f32.mrf.mxu0
    %v214 = vadd.f32 %v117, %v213
    %v215 = vpop.f32.mrf.mxu0
    %216 = vmatprep.mubr.f32.mxu0 0.0
    %217 = vmatmul.mubr.f32.gmra.mxu0 %v135
    %v218 = vpop.f32.mrf.mxu0
    %v219 = vadd.f32 %v122, %v218
    %v220 = vpop.f32.mrf.mxu0
    %221 = vdwg.mxu0
    %v222 = vtanh.pop %v204
    %v223 = vtanh.pop %v209
    %v224 = vtanh.pop %v214
    %v225 = vtanh.pop %v219
    %v226 = vld [vmem:[%s5] sm:$0xff]
    %v227 = vld [vmem:[%s5 + $0x8] sm:$0xff]
    %v228 = vld [vmem:[%s5 + $0x10] sm:$0xff]
    %v229 = vld [vmem:[%s5 + $0x18] sm:$0xff]
    %231 = vset.pattern.permute.xlu0 0
    %232 = vperm.xlu0 %231, %v226
    %v233 = vpop.permute.xlu0 %232
    %236 = vset.pattern.permute.xlu0 0
    %237 = vperm.xlu0 %236, %v227
    %v238 = vpop.permute.xlu0 %237
    %241 = vset.pattern.permute.xlu0 0
    %242 = vperm.xlu0 %241, %v228
    %v243 = vpop.permute.xlu0 %242
    %246 = vset.pattern.permute.xlu0 0
    %247 = vperm.xlu0 %246, %v229
    %v248 = vpop.permute.xlu0 %247
    %v250 = vmul.f32 %v233, %v222
    %v251 = vmul.f32 %v238, %v223
    %v252 = vmul.f32 %v243, %v224
    %v253 = vmul.f32 %v248, %v225
    %v254 = vadd.f32 %v250, %v251
    %v255 = vadd.f32 %v254, %v252
    %v256 = vadd.f32 %v255, %v253
    %v257 = vrot.slane %v256, 4
    %v258 = vadd.f32 %v256, %v257
    %v259 = vrot.slane %v258, 2
    %v260 = vadd.f32 %v258, %v259
    %v261 = vrot.slane %v260, 1
    %v262 = vadd.f32 %v260, %v261
    %v263 = vld [vmem:[#allocation2] sm:$0x1]
    %265 = vset.pattern.permute.xlu0 0
    %266 = vperm.xlu0 %265, %v263
    %v267 = vpop.permute.xlu0 %266
    %v269 = vlaneseq
    %v270 = vshrl.u32 %v269, 7
    %v271 = vsub.s32 0, %v270
    %v272 = vrot.slane %v267, %v271
    %v273 = vadd.f32 %v262, %v272
    %274 = vst [vmem:[#allocation3] sm:$0x1] %v273
    // Predicated region
    $region30: #{tpu_custom_call.1} parent=1 // pred_check
      _
    $region31: #{tpu_custom_call.1} parent=1 // pred_check_branch
      %276 = sbr.rel (0) target = $region33
    $region32: #{tpu_custom_call.1} parent=1 // pred_region
      %s278 = ssub.s32 16, 16
      %279 = vsyncadd [#allocation4], %s278
      %s281 = sshll.u32 [#allocation3], 4
      %s282 = int_to_ptr.vmem [resolvable:$true] %s281
      %284 = dma.vmem_to_hbm [thread:$0]  %s282, 16, %s7, [#allocation4]
    $region33: #{tpu_custom_call.1} parent=1 // pred_fallthru
      _
    // Predicated region
    $region34: #{tpu_custom_call.1} parent=1 // pred_check
      _
    $region35: #{tpu_custom_call.1} parent=1 // pred_check_branch
      %286 = sbr.rel (0) target = $region37
    $region36: #{tpu_custom_call.1} parent=1 // pred_region
      %287 = dma.done [#allocation4], 16
    $region37: #{tpu_custom_call.1} parent=1 // pred_fallthru
      _
    %288 = vsyncpa [#allocation4], 1

</llo_original>
